<compile_context>
chip_gen: v6e
topology: v6e:2x2x1
jax: 0.10.0
libtpu: 0.0.40
codegen_flags: <defaults>
</compile_context>

<pallas_src>
import functools

import jax
import jax.numpy as jnp
from jax.experimental import pallas as pl
from jax.experimental.pallas import tpu as pltpu


def _softplus(x):
    # matches torch.nn.Softplus(beta=1, threshold=20); overflow-safe
    return jnp.where(x > 20.0, x, jnp.log1p(jnp.exp(jnp.minimum(x, 20.0))))


def _round_up(n, m):
    return ((n + m - 1) // m) * m


def encoder_kernel(x_ref,
                   w1_ref, b1_ref,
                   w2_ref, b2_ref,
                   wh_ref, bh_ref,
                   out_ref,
                   *, state_dim: int, min_var: float):
    # In-kernel cast of the streamed x tile to the matmul dtype (keeps the
    # HBM stream at its original width; no separate wrapper cast pass).
    x = x_ref[...].astype(w1_ref.dtype)

    # hidden layer 1: Linear + ReLU  (Dropout -> identity at eval)
    h = jnp.dot(x, w1_ref[...], preferred_element_type=jnp.float32) + b1_ref[...]
    h = jnp.maximum(h, 0.0)

    # hidden layer 2: Linear + ReLU  (Dropout -> identity at eval)
    h = jnp.dot(h.astype(w2_ref.dtype), w2_ref[...],
                preferred_element_type=jnp.float32) + b2_ref[...]
    h = jnp.maximum(h, 0.0)

    # fused heads: columns [0, S) -> mean, columns [S, 2S) -> softplus var
    z = jnp.dot(h.astype(wh_ref.dtype), wh_ref[...],
                preferred_element_type=jnp.float32) + bh_ref[...]
    lane = jax.lax.broadcasted_iota(jnp.int32, z.shape, 1)
    out = jnp.where(lane >= state_dim, _softplus(z) + min_var, z)
    out_ref[...] = out.astype(out_ref.dtype)


def prepare_params(params, *, use_bf16=True):
    """One-time parameter prep (head fusion + matmul-dtype casts).

    Hoisted out of encoder_forward so the small concat/cast XLA ops and their
    HBM round-trips are not paid on every forward call.
    """
    mm_dtype = jnp.bfloat16 if use_bf16 else jnp.float32
    wh = jnp.concatenate([params["wm"], params["wv"]], axis=1)
    bh = jnp.concatenate([params["bm"], params["bv"]], axis=1)
    return dict(
        w1=params["w1"].astype(mm_dtype), b1=params["b1"].astype(jnp.float32),
        w2=params["w2"].astype(mm_dtype), b2=params["b2"].astype(jnp.float32),
        wh=wh.astype(mm_dtype),           bh=bh.astype(jnp.float32),
    )


def _vmem_bytes(TB, obs_dim, hidden_dim, two_s, x_bytes, w_bytes, out_bytes):
    """Rough per-step VMEM footprint estimate (double-buffered streams +
    resident weights + live in-kernel intermediates)."""
    x_tiles   = 2 * TB * obs_dim * x_bytes
    out_tiles = 2 * TB * two_s * out_bytes
    weights   = 2 * w_bytes * (obs_dim * hidden_dim
                               + hidden_dim * hidden_dim
                               + hidden_dim * two_s)
    biases    = 2 * 4 * (2 * hidden_dim + two_s)
    interm    = TB * (hidden_dim * (4 + w_bytes) * 2 + two_s * 3 * 4)
    return x_tiles + out_tiles + weights + biases + interm


def encoder_forward(x, prepared, *, min_var=0.001, tile_batch=8192,
                    out_dtype=jnp.float32, vmem_budget_bytes=28 << 20):
    """x: [B, obs_dim] f32 -> (mean [B, state_dim], var [B, state_dim])."""
    B, obs_dim = x.shape
    hidden_dim = prepared["w1"].shape[1]
    two_s = prepared["wh"].shape[1]
    state_dim = two_s // 2

    x_bytes = x.dtype.itemsize
    w_bytes = prepared["w1"].dtype.itemsize
    out_bytes = jnp.dtype(out_dtype).itemsize

    # Big batch tile (overhead amortization), shrunk to fit the VMEM budget
    # (28 MiB default -> safe on v7x's 32 MiB scoped / 64 MiB physical VMEM).
    TB = _round_up(min(tile_batch, _round_up(B, 8)), 8)
    while TB > 256 and _vmem_bytes(TB, obs_dim, hidden_dim, two_s,
                                   x_bytes, w_bytes, out_bytes) > vmem_budget_bytes:
        TB = max(256, _round_up(TB // 2, 8))
    footprint = _vmem_bytes(TB, obs_dim, hidden_dim, two_s,
                            x_bytes, w_bytes, out_bytes)
    # Explicit scoped-VMEM limit: lifts v5e's 16 MiB default, stays under
    # v7x's 64 MiB physical.
    vmem_limit = int(min(max(2 * footprint, 16 << 20), 56 << 20))

    # Ragged last block handled by Pallas masking (no jnp.pad pass over x,
    # no out[:B] slice copy).
    grid = (pl.cdiv(B, TB),)

    kernel = functools.partial(encoder_kernel,
                               state_dim=state_dim, min_var=min_var)

    # Weights/biases: constant index_map -> stay VMEM-resident across steps.
    const = lambda shape: pl.BlockSpec(shape, lambda i: (0, 0))

    flops = 2 * B * (obs_dim * hidden_dim
                     + hidden_dim * hidden_dim
                     + hidden_dim * two_s)
    bytes_accessed = (B * obs_dim * x_bytes
                      + w_bytes * (obs_dim * hidden_dim
                                   + hidden_dim * hidden_dim
                                   + hidden_dim * two_s)
                      + 4 * (2 * hidden_dim + two_s)
                      + B * two_s * out_bytes)

    out = pl.pallas_call(
        kernel,
        out_shape=jax.ShapeDtypeStruct((B, two_s), out_dtype),
        grid=grid,
        in_specs=[
            pl.BlockSpec((TB, obs_dim), lambda i: (i, 0)),   # x: streamed tiles
            const((obs_dim, hidden_dim)),
            const((1, hidden_dim)),
            const((hidden_dim, hidden_dim)),
            const((1, hidden_dim)),
            const((hidden_dim, two_s)),
            const((1, two_s)),
        ],
        out_specs=pl.BlockSpec((TB, two_s), lambda i: (i, 0)),
        compiler_params=pltpu.CompilerParams(
            dimension_semantics=("parallel",),               # dual-TC on v7x
            vmem_limit_bytes=vmem_limit),
        cost_estimate=pl.CostEstimate(
            flops=flops,
            transcendentals=2 * B * two_s,                   # exp + log1p
            bytes_accessed=bytes_accessed),
    )(x, prepared["w1"], prepared["b1"], prepared["w2"], prepared["b2"],
      prepared["wh"], prepared["bh"])

    return out[:, :state_dim], out[:, state_dim:]


def init_params(key, observation_dim, state_dim, hidden_dim=None):
    """Deterministic parameter init mimicking nn.Linear's default (uniform)."""
    hidden_dim = hidden_dim if hidden_dim is not None else 2 * observation_dim

    def linear(k, in_dim, out_dim):
        kw, kb = jax.random.split(k)
        bound = 1.0 / jnp.sqrt(in_dim)
        w = jax.random.uniform(kw, (in_dim, out_dim), jnp.float32, -bound, bound)
        b = jax.random.uniform(kb, (1, out_dim), jnp.float32, -bound, bound)
        return w, b

    k1, k2, k3, k4 = jax.random.split(key, 4)
    w1, b1 = linear(k1, observation_dim, hidden_dim)
    w2, b2 = linear(k2, hidden_dim, hidden_dim)
    wm, bm = linear(k3, hidden_dim, state_dim)
    wv, bv = linear(k4, hidden_dim, state_dim)
    return dict(w1=w1, b1=b1, w2=w2, b2=b2, wm=wm, bm=bm, wv=wv, bv=bv)


def _ref_forward(x, prepared, min_var):
    """Plain-JAX reference with the same (bf16 matmul, f32 accum) numerics."""
    d = prepared["w1"].dtype
    h = jnp.maximum(jnp.dot(x.astype(d), prepared["w1"],
                            preferred_element_type=jnp.float32)
                    + prepared["b1"], 0.0)
    h = jnp.maximum(jnp.dot(h.astype(d), prepared["w2"],
                            preferred_element_type=jnp.float32)
                    + prepared["b2"], 0.0)
    z = jnp.dot(h.astype(d), prepared["wh"],
                preferred_element_type=jnp.float32) + prepared["bh"]
    S = prepared["wh"].shape[1] // 2
    return z[:, :S], jax.nn.softplus(z[:, S:]) + min_var


if __name__ == "__main__":
    observation_dim = 16
    state_dim = 8
    hidden_dim = 32       # default would be 2 * observation_dim = 32
    batch = 8

    key = jax.random.PRNGKey(0)
    k_x, k_p = jax.random.split(key)
    x = jax.random.normal(k_x, (batch, observation_dim), jnp.float32)
    params = init_params(k_p, observation_dim, state_dim, hidden_dim)
    prepared = prepare_params(params, use_bf16=True)   # one-time prep

    mean, var = encoder_forward(x, prepared, min_var=0.001)
    jax.block_until_ready((mean, var))

    assert mean.shape == (batch, state_dim)
    assert var.shape == (batch, state_dim)
    assert bool(jnp.all(var > 0.0))            # softplus + min_var > 0
    assert bool(jnp.all(jnp.isfinite(mean)))
    assert bool(jnp.all(jnp.isfinite(var)))

    mean_ref, var_ref = _ref_forward(x, prepared, 0.001)
    assert bool(jnp.allclose(mean, mean_ref, rtol=1e-3, atol=1e-4))
    assert bool(jnp.allclose(var, var_ref, rtol=1e-3, atol=1e-4))

    print("KERNEL_OK")
</pallas_src>

<mosaic_0001>
module attributes {stable_mosaic.version = 11 : i64} {
  func.func @encoder_kernel(%arg0: i32, %arg1: memref<8x16xf32, #tpu.memory_space<vmem>>, %arg2: memref<16x32xbf16, #tpu.memory_space<vmem>>, %arg3: memref<1x32xf32, #tpu.memory_space<vmem>>, %arg4: memref<32x32xbf16, #tpu.memory_space<vmem>>, %arg5: memref<1x32xf32, #tpu.memory_space<vmem>>, %arg6: memref<32x16xbf16, #tpu.memory_space<vmem>>, %arg7: memref<1x16xf32, #tpu.memory_space<vmem>>, %arg8: memref<8x16xf32, #tpu.memory_space<vmem>>) attributes {dimension_semantics = [#tpu.dimension_semantics<parallel>], iteration_bounds = array<i64: 1>, scalar_prefetch = 0 : i64, scratch_operands = 0 : i64, tpu.core_type = #tpu.core_type<tc>, window_params = [{transform_indices = @transform_0, window_bounds = array<i64: 8, 16>}, {pipeline_mode = #tpu.pipeline_mode<synchronous>, transform_indices = @transform_1, window_bounds = array<i64: 16, 32>}, {pipeline_mode = #tpu.pipeline_mode<synchronous>, transform_indices = @transform_2, window_bounds = array<i64: 1, 32>}, {pipeline_mode = #tpu.pipeline_mode<synchronous>, transform_indices = @transform_3, window_bounds = array<i64: 32, 32>}, {pipeline_mode = #tpu.pipeline_mode<synchronous>, transform_indices = @transform_4, window_bounds = array<i64: 1, 32>}, {pipeline_mode = #tpu.pipeline_mode<synchronous>, transform_indices = @transform_5, window_bounds = array<i64: 32, 16>}, {pipeline_mode = #tpu.pipeline_mode<synchronous>, transform_indices = @transform_6, window_bounds = array<i64: 1, 16>}, {transform_indices = @transform_7, window_bounds = array<i64: 8, 16>}]} {
    %c0 = arith.constant 0 : index
    %c0_0 = arith.constant 0 : index
    %0 = vector.load %arg1[%c0, %c0_0] : memref<8x16xf32, #tpu.memory_space<vmem>>, vector<8x16xf32>
    %1 = arith.truncf %0 : vector<8x16xf32> to vector<8x16xbf16>
    %c0_1 = arith.constant 0 : index
    %c0_2 = arith.constant 0 : index
    %2 = vector.load %arg2[%c0_1, %c0_2] : memref<16x32xbf16, #tpu.memory_space<vmem>>, vector<16x32xbf16>
    %cst = arith.constant dense<0.000000e+00> : vector<8x32xf32>
    %3 = tpu.matmul %1, %2, %cst {dimension_numbers = #tpu.dot_dimension_numbers<[1], [0], [0], [1], [0, 0, 1, 1], [], []>} : vector<8x16xbf16>, vector<16x32xbf16>, vector<8x32xf32> -> vector<8x32xf32>
    %c0_3 = arith.constant 0 : index
    %c0_4 = arith.constant 0 : index
    %4 = vector.load %arg3[%c0_3, %c0_4] : memref<1x32xf32, #tpu.memory_space<vmem>>, vector<1x32xf32>
    %5 = vector.broadcast %4 : vector<1x32xf32> to vector<8x32xf32>
    %6 = arith.addf %3, %5 : vector<8x32xf32>
    %cst_5 = arith.constant 0.000000e+00 : f32
    %7 = vector.broadcast %cst_5 : f32 to vector<8x32xf32>
    %8 = arith.maximumf %6, %7 : vector<8x32xf32>
    %9 = arith.truncf %8 : vector<8x32xf32> to vector<8x32xbf16>
    %c0_6 = arith.constant 0 : index
    %c0_7 = arith.constant 0 : index
    %10 = vector.load %arg4[%c0_6, %c0_7] : memref<32x32xbf16, #tpu.memory_space<vmem>>, vector<32x32xbf16>
    %cst_8 = arith.constant dense<0.000000e+00> : vector<8x32xf32>
    %11 = tpu.matmul %9, %10, %cst_8 {dimension_numbers = #tpu.dot_dimension_numbers<[1], [0], [0], [1], [0, 0, 1, 1], [], []>} : vector<8x32xbf16>, vector<32x32xbf16>, vector<8x32xf32> -> vector<8x32xf32>
    %c0_9 = arith.constant 0 : index
    %c0_10 = arith.constant 0 : index
    %12 = vector.load %arg5[%c0_9, %c0_10] : memref<1x32xf32, #tpu.memory_space<vmem>>, vector<1x32xf32>
    %13 = vector.broadcast %12 : vector<1x32xf32> to vector<8x32xf32>
    %14 = arith.addf %11, %13 : vector<8x32xf32>
    %cst_11 = arith.constant 0.000000e+00 : f32
    %15 = vector.broadcast %cst_11 : f32 to vector<8x32xf32>
    %16 = arith.maximumf %14, %15 : vector<8x32xf32>
    %17 = arith.truncf %16 : vector<8x32xf32> to vector<8x32xbf16>
    %c0_12 = arith.constant 0 : index
    %c0_13 = arith.constant 0 : index
    %18 = vector.load %arg6[%c0_12, %c0_13] : memref<32x16xbf16, #tpu.memory_space<vmem>>, vector<32x16xbf16>
    %cst_14 = arith.constant dense<0.000000e+00> : vector<8x16xf32>
    %19 = tpu.matmul %17, %18, %cst_14 {dimension_numbers = #tpu.dot_dimension_numbers<[1], [0], [0], [1], [0, 0, 1, 1], [], []>} : vector<8x32xbf16>, vector<32x16xbf16>, vector<8x16xf32> -> vector<8x16xf32>
    %c0_15 = arith.constant 0 : index
    %c0_16 = arith.constant 0 : index
    %20 = vector.load %arg7[%c0_15, %c0_16] : memref<1x16xf32, #tpu.memory_space<vmem>>, vector<1x16xf32>
    %21 = vector.broadcast %20 : vector<1x16xf32> to vector<8x16xf32>
    %22 = arith.addf %19, %21 : vector<8x16xf32>
    %23 = tpu.iota {dimensions = array<i32: 1>} : vector<8x16xi32>
    %c8_i32 = arith.constant 8 : i32
    %24 = vector.broadcast %c8_i32 : i32 to vector<8x16xi32>
    %25 = arith.cmpi sge, %23, %24 : vector<8x16xi32>
    %cst_17 = arith.constant 2.000000e+01 : f32
    %26 = vector.broadcast %cst_17 : f32 to vector<8x16xf32>
    %27 = arith.cmpf ogt, %22, %26 : vector<8x16xf32>
    %cst_18 = arith.constant 2.000000e+01 : f32
    %28 = vector.broadcast %cst_18 : f32 to vector<8x16xf32>
    %29 = arith.minimumf %22, %28 : vector<8x16xf32>
    %30 = math.exp %29 : vector<8x16xf32>
    %31 = math.log1p %30 : vector<8x16xf32>
    %32 = arith.select %27, %22, %31 : vector<8x16xi1>, vector<8x16xf32>
    %cst_19 = arith.constant 1.000000e-03 : f32
    %33 = vector.broadcast %cst_19 : f32 to vector<8x16xf32>
    %34 = arith.addf %32, %33 : vector<8x16xf32>
    %35 = arith.select %25, %34, %22 : vector<8x16xi1>, vector<8x16xf32>
    %c0_20 = arith.constant 0 : index
    %c0_21 = arith.constant 0 : index
    %36 = vector.load %arg8[%c0_20, %c0_21] : memref<8x16xf32, #tpu.memory_space<vmem>>, vector<8x16xf32>
    tpu.vector_store %arg8[%c0_20, %c0_21], %35 {strides = array<i32>} : memref<8x16xf32, #tpu.memory_space<vmem>>, vector<8x16xf32>,
    return
  }
  func.func @transform_0(%arg0: i32) -> (i32, i32) {
    %c0_i32 = arith.constant 0 : i32
    %c0_i32_0 = arith.constant 0 : i32
    return %arg0, %c0_i32 : i32, i32
  }
  func.func @transform_1(%arg0: i32) -> (i32, i32) {
    %c0_i32 = arith.constant 0 : i32
    %c0_i32_0 = arith.constant 0 : i32
    %c0_i32_1 = arith.constant 0 : i32
    return %c0_i32, %c0_i32_0 : i32, i32
  }
  func.func @transform_2(%arg0: i32) -> (i32, i32) {
    %c0_i32 = arith.constant 0 : i32
    %c0_i32_0 = arith.constant 0 : i32
    %c0_i32_1 = arith.constant 0 : i32
    return %c0_i32, %c0_i32_0 : i32, i32
  }
  func.func @transform_3(%arg0: i32) -> (i32, i32) {
    %c0_i32 = arith.constant 0 : i32
    %c0_i32_0 = arith.constant 0 : i32
    %c0_i32_1 = arith.constant 0 : i32
    return %c0_i32, %c0_i32_0 : i32, i32
  }
  func.func @transform_4(%arg0: i32) -> (i32, i32) {
    %c0_i32 = arith.constant 0 : i32
    %c0_i32_0 = arith.constant 0 : i32
    %c0_i32_1 = arith.constant 0 : i32
    return %c0_i32, %c0_i32_0 : i32, i32
  }
  func.func @transform_5(%arg0: i32) -> (i32, i32) {
    %c0_i32 = arith.constant 0 : i32
    %c0_i32_0 = arith.constant 0 : i32
    %c0_i32_1 = arith.constant 0 : i32
    return %c0_i32, %c0_i32_0 : i32, i32
  }
  func.func @transform_6(%arg0: i32) -> (i32, i32) {
    %c0_i32 = arith.constant 0 : i32
    %c0_i32_0 = arith.constant 0 : i32
    %c0_i32_1 = arith.constant 0 : i32
    return %c0_i32, %c0_i32_0 : i32, i32
  }
  func.func @transform_7(%arg0: i32) -> (i32, i32) {
    %c0_i32 = arith.constant 0 : i32
    %c0_i32_0 = arith.constant 0 : i32
    return %arg0, %c0_i32 : i32, i32
  }
}

</mosaic_0001>

<llo_original>
// kernel: tpu_custom_call.1
$region0: #{tpu_custom_call.1}
  #allocation0 [shape = 'u32[]', space=smem, size = 0x4, offset = 0x4, fixed_abs, tag = 'smem constant byte address 0x4 - core index']
  #allocation1 [shape = 'u32[144,128]{1,0:T(1,128)}', space=vmem, size = 0x12000, scoped, tag = 'internal scratch']
  %s0 = inlined_call_operand.vmem [shape: f32[8,16], index: 0, kind: input, shape index: {}]
  %s1 = inlined_call_operand.hbm [shape: bf16[16,32], index: 1, kind: input, shape index: {}]
  %s2 = inlined_call_operand.vmem [shape: f32[1,32], index: 2, kind: input, shape index: {}]
  %s3 = inlined_call_operand.vmem [shape: bf16[32,32], index: 3, kind: input, shape index: {}]
  %s4 = inlined_call_operand.hbm [shape: f32[1,32], index: 4, kind: input, shape index: {}]
  %s5 = inlined_call_operand.vmem [shape: bf16[32,16], index: 5, kind: input, shape index: {}]
  %s6 = inlined_call_operand.vmem [shape: f32[1,16], index: 6, kind: input, shape index: {}]
  %s7 = inlined_call_operand.hbm [shape: f32[8,16], index: 7, kind: output, shape index: {}]
  %s8 = sld [smem:[#allocation0]]
  $region46: #{tpu_custom_call.1} parent=0
    _
  %s10 = ssub.s32 1, %s8
  %s11 = scalar_select 0, %s10, %s8
  $region1: #{tpu_custom_call.1} parent=0
    #allocation2 [shape = 'u8[4096]{0}', space=vmem, size = 0x1000, scoped, tag = 'input window, operand 1, single buffered']
    #allocation3 [shape = 's32[1]{0}', space=sflag, size = 0x4, scoped, tag = 'scoped memory for tpu_custom_call.1']
    #allocation4 [shape = 's32[1]{0}', space=sflag, size = 0x4, scoped, tag = 'scoped memory for tpu_custom_call.1']
    #allocation5 [shape = 'u8[512]{0}', space=vmem, size = 0x400, scoped, tag = 'input window, operand 4, single buffered']
    #allocation6 [shape = 's32[1]{0}', space=sflag, size = 0x4, scoped, tag = 'scoped memory for tpu_custom_call.1']
    #allocation7 [shape = 'u8[4096]{0}', space=vmem, size = 0x1000, scoped, tag = 'output window, operand 0, single buffered']
    %12 = vsyncpa [#allocation3], 0
    %13 = vsyncpa [#allocation6], 0
    %14 = vsyncpa [#allocation4], 0
    // Predicated region
    $region2: #{tpu_custom_call.1} parent=1 // pred_check
      _
    $region3: #{tpu_custom_call.1} parent=1 // pred_check_branch
      %16 = sbr.rel (0) target = $region5
    $region4: #{tpu_custom_call.1} parent=1 // pred_region
      _
    $region5: #{tpu_custom_call.1} parent=1 // pred_fallthru
      _
    // Predicated region
    $region6: #{tpu_custom_call.1} parent=1 // pred_check
      _
    $region7: #{tpu_custom_call.1} parent=1 // pred_check_branch
      %18 = sbr.rel (0) target = $region9
    $region8: #{tpu_custom_call.1} parent=1 // pred_region
      %s20 = ssub.s32 128, 128
      %21 = vsyncadd [#allocation3], %s20
      %s22 = sshll.u32 [#allocation2], 4
      %s23 = int_to_ptr.vmem [resolvable:$true] %s22
      %28 = dma.hbm_to_vmem [thread:$0]  %s1, 128, %s23, [#allocation3], 64, 64, 4
    $region9: #{tpu_custom_call.1} parent=1 // pred_fallthru
      _
    // Predicated region
    $region10: #{tpu_custom_call.1} parent=1 // pred_check
      _
    $region11: #{tpu_custom_call.1} parent=1 // pred_check_branch
      %30 = sbr.rel (0) target = $region13
    $region12: #{tpu_custom_call.1} parent=1 // pred_region
      _
    $region13: #{tpu_custom_call.1} parent=1 // pred_fallthru
      _
    // Predicated region
    $region14: #{tpu_custom_call.1} parent=1 // pred_check
      _
    $region15: #{tpu_custom_call.1} parent=1 // pred_check_branch
      %32 = sbr.rel (0) target = $region17
    $region16: #{tpu_custom_call.1} parent=1 // pred_region
      _
    $region17: #{tpu_custom_call.1} parent=1 // pred_fallthru
      _
    // Predicated region
    $region18: #{tpu_custom_call.1} parent=1 // pred_check
      _
    $region19: #{tpu_custom_call.1} parent=1 // pred_check_branch
      %34 = sbr.rel (0) target = $region21
    $region20: #{tpu_custom_call.1} parent=1 // pred_region
      %s36 = ssub.s32 16, 16
      %37 = vsyncadd [#allocation6], %s36
      %s39 = sshll.u32 [#allocation5], 4
      %s40 = int_to_ptr.vmem [resolvable:$true] %s39
      %42 = dma.hbm_to_vmem [thread:$0]  %s4, 16, %s40, [#allocation6]
    $region21: #{tpu_custom_call.1} parent=1 // pred_fallthru
      _
    // Predicated region
    $region22: #{tpu_custom_call.1} parent=1 // pred_check
      _
    $region23: #{tpu_custom_call.1} parent=1 // pred_check_branch
      %44 = sbr.rel (0) target = $region25
    $region24: #{tpu_custom_call.1} parent=1 // pred_region
      _
    $region25: #{tpu_custom_call.1} parent=1 // pred_fallthru
      _
    // Predicated region
    $region26: #{tpu_custom_call.1} parent=1 // pred_check
      _
    $region27: #{tpu_custom_call.1} parent=1 // pred_check_branch
      %46 = sbr.rel (0) target = $region29
    $region28: #{tpu_custom_call.1} parent=1 // pred_region
      _
    $region29: #{tpu_custom_call.1} parent=1 // pred_fallthru
      _
    // Predicated region
    $region30: #{tpu_custom_call.1} parent=1 // pred_check
      _
    $region31: #{tpu_custom_call.1} parent=1 // pred_check_branch
      %48 = sbr.rel (0) target = $region33
    $region32: #{tpu_custom_call.1} parent=1 // pred_region
      %49 = dma.done [#allocation3], 128
    $region33: #{tpu_custom_call.1} parent=1 // pred_fallthru
      _
    // Predicated region
    $region34: #{tpu_custom_call.1} parent=1 // pred_check
      _
    $region35: #{tpu_custom_call.1} parent=1 // pred_check_branch
      %51 = sbr.rel (0) target = $region37
    $region36: #{tpu_custom_call.1} parent=1 // pred_region
      %52 = dma.done [#allocation6], 16
    $region37: #{tpu_custom_call.1} parent=1 // pred_fallthru
      _
    %v54 = vld [vmem:[%s0] sm:$0xff]
    %v55 = vpack.c.bf16 %v54, %v54
    %v56 = vld [vmem:[#allocation2] sm:$0xf]
    %v57 = vld [vmem:[#allocation2 + $0x4] sm:$0xf]
    %v58 = vld [vmem:[%s2] sm:$0x1]
    %v60 = vlaneseq
    %v61 = vshrl.u32 %v60, 7
    %v62 = vsub.s32 0, %v61
    %v63 = vrot.slane %v58, %v62
    %v67 = vunpack.c.l.b16 %v56
    %v68 = vunpack.c.l.b16 %v57
    %v69 = vpack.c.b16 %v68, %v67
    %vm71 = vcmask 130048
    %v73 = vsel %vm71, %v55, 0
    %75 = vmatprep.subr.bf16.mxu0 0
    %76 = vmatpush1.bf16.msra.mxu0 0
    %77 = vmatprep.subr.bf16.mxu0 0
    %78 = vmatpush1.bf16.msra.mxu0 0
    %79 = vmatprep.subr.bf16.mxu0 0
    %80 = vmatpush1.bf16.msra.mxu0 0
    %81 = vmatprep.subr.bf16.mxu0 0
    %82 = vmatpush1.bf16.msra.mxu0 0
    %83 = vmatprep.subr.bf16.mxu0 0
    %84 = vmatpush1.bf16.msra.mxu0 0
    %85 = vmatprep.subr.bf16.mxu0 0
    %86 = vmatpush1.bf16.msra.mxu0 0
    %87 = vmatprep.subr.bf16.mxu0 0
    %88 = vmatpush1.bf16.msra.mxu0 0
    %89 = vmatprep.subr.bf16.mxu0 0
    %90 = vmatpush1.bf16.msra.mxu0 %v69
    %91 = vmatprep.subr.bf16.mxu0 0
    %92 = vmatpush2.bf16.msra.mxu0 0
    %93 = vmatprep.subr.bf16.mxu0 0
    %94 = vmatpush2.bf16.msra.mxu0 0
    %95 = vmatprep.subr.bf16.mxu0 0
    %96 = vmatpush2.bf16.msra.mxu0 0
    %97 = vmatprep.subr.bf16.mxu0 0
    %98 = vmatpush2.bf16.msra.mxu0 0
    %99 = vmatprep.subr.bf16.mxu0 0
    %100 = vmatpush2.bf16.msra.mxu0 0
    %101 = vmatprep.subr.bf16.mxu0 0
    %102 = vmatpush2.bf16.msra.mxu0 0
    %103 = vmatprep.subr.bf16.mxu0 0
    %104 = vmatpush2.bf16.msra.mxu0 0
    %105 = vmatprep.subr.bf16.mxu0 0
    %106 = vmatpush2.bf16.msra.mxu0 0
    %107 = vmatprep.mubr.bf16.mxu0 0
    %108 = vmatmul.mubr.bf16.gmra.mxu0 %v73
    %v109 = vpop.f32.mrf.mxu0
    %v110 = vadd.f32 %v63, %v109
    %v111 = vpop.f32.mrf.mxu0
    %v112 = vpop.f32.mrf.mxu0
    %v113 = vpop.f32.mrf.mxu0
    %114 = vdwg.mxu0
    %v115 = vmax.f32 %v110, 0.0
    %v116 = vpack.c.bf16 %v115, %v115
    %v117 = vld [vmem:[%s3] sm:$0xf]
    %v118 = vld [vmem:[%s3 + $0x4] sm:$0xf]
    %v119 = vld [vmem:[%s3 + $0x8] sm:$0xf]
    %v120 = vld [vmem:[%s3 + $0xc] sm:$0xf]
    %v121 = vld [vmem:[#allocation5] sm:$0x1]
    %v123 = vlaneseq
    %v124 = vshrl.u32 %v123, 7
    %v125 = vsub.s32 0, %v124
    %v126 = vrot.slane %v121, %v125
    %v132 = vunpack.c.l.b16 %v117
    %v133 = vunpack.c.l.b16 %v118
    %v134 = vunpack.c.l.b16 %v119
    %v135 = vunpack.c.l.b16 %v120
    %v136 = vpack.c.b16 %v133, %v132
    %v137 = vpack.c.b16 %v135, %v134
    %vm140 = vcmask 261120
    %v142 = vsel %vm140, %v116, 0
    %144 = vmatprep.subr.bf16.mxu0 0
    %145 = vmatpush1.bf16.msra.mxu0 0
    %146 = vmatprep.subr.bf16.mxu0 0
    %147 = vmatpush1.bf16.msra.mxu0 0
    %148 = vmatprep.subr.bf16.mxu0 0
    %149 = vmatpush1.bf16.msra.mxu0 0
    %150 = vmatprep.subr.bf16.mxu0 0
    %151 = vmatpush1.bf16.msra.mxu0 0
    %152 = vmatprep.subr.bf16.mxu0 0
    %153 = vmatpush1.bf16.msra.mxu0 0
    %154 = vmatprep.subr.bf16.mxu0 0
    %155 = vmatpush1.bf16.msra.mxu0 0
    %156 = vmatprep.subr.bf16.mxu0 0
    %157 = vmatpush1.bf16.msra.mxu0 %v137
    %158 = vmatprep.subr.bf16.mxu0 0
    %159 = vmatpush1.bf16.msra.mxu0 %v136
    %160 = vmatprep.subr.bf16.mxu0 0
    %161 = vmatpush2.bf16.msra.mxu0 0
    %162 = vmatprep.subr.bf16.mxu0 0
    %163 = vmatpush2.bf16.msra.mxu0 0
    %164 = vmatprep.subr.bf16.mxu0 0
    %165 = vmatpush2.bf16.msra.mxu0 0
    %166 = vmatprep.subr.bf16.mxu0 0
    %167 = vmatpush2.bf16.msra.mxu0 0
    %168 = vmatprep.subr.bf16.mxu0 0
    %169 = vmatpush2.bf16.msra.mxu0 0
    %170 = vmatprep.subr.bf16.mxu0 0
    %171 = vmatpush2.bf16.msra.mxu0 0
    %172 = vmatprep.subr.bf16.mxu0 0
    %173 = vmatpush2.bf16.msra.mxu0 0
    %174 = vmatprep.subr.bf16.mxu0 0
    %175 = vmatpush2.bf16.msra.mxu0 0
    %176 = vmatprep.mubr.bf16.mxu0 0
    %177 = vmatmul.mubr.bf16.gmra.mxu0 %v142
    %v178 = vpop.f32.mrf.mxu0
    %v179 = vadd.f32 %v126, %v178
    %v180 = vpop.f32.mrf.mxu0
    %v181 = vpop.f32.mrf.mxu0
    %v182 = vpop.f32.mrf.mxu0
    %183 = vdwg.mxu0
    %v184 = vmax.f32 %v179, 0.0
    %v185 = vpack.c.bf16 %v184, %v184
    %v186 = vld [vmem:[%s5] sm:$0xf]
    %v187 = vld [vmem:[%s5 + $0x4] sm:$0xf]
    %v188 = vld [vmem:[%s5 + $0x8] sm:$0xf]
    %v189 = vld [vmem:[%s5 + $0xc] sm:$0xf]
    %v190 = vld [vmem:[%s6] sm:$0x1]
    %v192 = vlaneseq
    %v193 = vshrl.u32 %v192, 7
    %v194 = vsub.s32 0, %v193
    %v195 = vrot.slane %v190, %v194
    %v201 = vunpack.c.l.b16 %v186
    %v202 = vunpack.c.l.b16 %v187
    %v203 = vunpack.c.l.b16 %v188
    %v204 = vunpack.c.l.b16 %v189
    %v205 = vpack.c.b16 %v202, %v201
    %v206 = vpack.c.b16 %v204, %v203
    %v210 = vsel %vm140, %v185, 0
    %212 = vmatprep.subr.bf16.mxu0 0
    %213 = vmatpush1.bf16.msra.mxu0 0
    %214 = vmatprep.subr.bf16.mxu0 0
    %215 = vmatpush1.bf16.msra.mxu0 0
    %216 = vmatprep.subr.bf16.mxu0 0
    %217 = vmatpush1.bf16.msra.mxu0 0
    %218 = vmatprep.subr.bf16.mxu0 0
    %219 = vmatpush1.bf16.msra.mxu0 0
    %220 = vmatprep.subr.bf16.mxu0 0
    %221 = vmatpush1.bf16.msra.mxu0 0
    %222 = vmatprep.subr.bf16.mxu0 0
    %223 = vmatpush1.bf16.msra.mxu0 0
    %224 = vmatprep.subr.bf16.mxu0 0
    %225 = vmatpush1.bf16.msra.mxu0 %v206
    %226 = vmatprep.subr.bf16.mxu0 0
    %227 = vmatpush1.bf16.msra.mxu0 %v205
    %228 = vmatprep.subr.bf16.mxu0 0
    %229 = vmatpush2.bf16.msra.mxu0 0
    %230 = vmatprep.subr.bf16.mxu0 0
    %231 = vmatpush2.bf16.msra.mxu0 0
    %232 = vmatprep.subr.bf16.mxu0 0
    %233 = vmatpush2.bf16.msra.mxu0 0
    %234 = vmatprep.subr.bf16.mxu0 0
    %235 = vmatpush2.bf16.msra.mxu0 0
    %236 = vmatprep.subr.bf16.mxu0 0
    %237 = vmatpush2.bf16.msra.mxu0 0
    %238 = vmatprep.subr.bf16.mxu0 0
    %239 = vmatpush2.bf16.msra.mxu0 0
    %240 = vmatprep.subr.bf16.mxu0 0
    %241 = vmatpush2.bf16.msra.mxu0 0
    %242 = vmatprep.subr.bf16.mxu0 0
    %243 = vmatpush2.bf16.msra.mxu0 0
    %244 = vmatprep.mubr.bf16.mxu0 0
    %245 = vmatmul.mubr.bf16.gmra.mxu0 %v210
    %v246 = vpop.f32.mrf.mxu0
    %v247 = vadd.f32 %v195, %v246
    %v248 = vpop.f32.mrf.mxu0
    %v249 = vpop.f32.mrf.mxu0
    %v250 = vpop.f32.mrf.mxu0
    %251 = vdwg.mxu0
    %v252 = vlaneseq
    %v253 = vand.u32 %v252, 127
    %vm254 = vcmp.ge.s32.totalorder %v253, 8
    %vm255 = vcmp.gt.f32.partialorder %v247, 20.0
    %v256 = vmin.f32 %v247, 20.0
    %v257 = vmul.f32 %v256, 1.442695
    %v258 = vpow.pop %v257
    %v259 = vadd.f32 %v258, 1.0
    %v260 = vlog2.pop %v259
    %v261 = vmul.f32 %v260, 0.6931472
    %v262 = vmul.f32 -0.5, %v258
    %v263 = vadd.f32 %v262, 1.0
    %v264 = vmul.f32 %v263, %v258
    %v265 = vand.u32 2147483647, %v258
    %vm266 = vcmp.lt.f32.partialorder %v265, 0.0004427343
    %v267 = vsel %vm266, %v264, %v261
    %v268 = vsel %vm255, %v247, %v267
    %v269 = vadd.f32 %v268, 0.001
    %v270 = vsel %vm254, %v269, %v247
    %271 = vst.msk [vmem:[#allocation7] sm:$0xff] %vm71, %v270
    // Predicated region
    $region38: #{tpu_custom_call.1} parent=1 // pred_check
      _
    $region39: #{tpu_custom_call.1} parent=1 // pred_check_branch
      %273 = sbr.rel (0) target = $region41
    $region40: #{tpu_custom_call.1} parent=1 // pred_region
      %s275 = ssub.s32 128, 128
      %276 = vsyncadd [#allocation4], %s275
      %s278 = sshll.u32 [#allocation7], 4
      %s279 = int_to_ptr.vmem [resolvable:$true] %s278
      %281 = dma.vmem_to_hbm [thread:$0]  %s279, 128, %s7, [#allocation4]
    $region41: #{tpu_custom_call.1} parent=1 // pred_fallthru
      _
    // Predicated region
    $region42: #{tpu_custom_call.1} parent=1 // pred_check
      _
    $region43: #{tpu_custom_call.1} parent=1 // pred_check_branch
      %283 = sbr.rel (0) target = $region45
    $region44: #{tpu_custom_call.1} parent=1 // pred_region
      %284 = dma.done [#allocation4], 128
    $region45: #{tpu_custom_call.1} parent=1 // pred_fallthru
      _
    %285 = vsyncpa [#allocation3], 1
    %286 = vsyncpa [#allocation6], 1
    %287 = vsyncpa [#allocation4], 1

</llo_original>
